<compile_context>
chip_gen: v6e
topology: v6e:2x2x1
jax: 0.10.0
libtpu: 0.0.40
codegen_flags: <defaults>
</compile_context>

<pallas_src>
import functools

import jax
import jax.numpy as jnp
from jax.experimental import pallas as pl
from jax.experimental.pallas import tpu as pltpu

PATCH = 16
HIDDEN = 768  # vit_b_16 conv_proj out-channels == in_features of the fc head


def _round_up(x, m):
    return (x + m - 1) // m * m


def folded_head_kernel(pooled_ref, wf_ref, bf_ref, out_ref):
    # pooled_ref: (BB, K)       mean-over-patches features for BB batch rows
    # wf_ref:     (K, NC_pad)   folded weight  (conv_proj.T @ fc.T), class-padded to 128
    # bf_ref:     (1, NC_pad)   folded bias    (conv_b @ fc.T + fc_b), class-padded
    # out_ref:    (BB, NC_pad)  lane-dense logits block
    out_ref[...] = (
        jnp.dot(pooled_ref[...], wf_ref[...], preferred_element_type=jnp.float32)
        + bf_ref[...]
    )


@functools.partial(jax.jit, static_argnames=("batch_block",))
def vision_transformer_forward(x_nchw, conv_w, conv_b, fc_w, fc_b, *, batch_block=8):
    """x_nchw: (B, C, H, W) f32; conv_w: (HIDDEN, C, 16, 16); fc_w: (num_classes, HIDDEN)."""
    B, C, H, W = x_nchw.shape
    # A stride-16 VALID conv would silently drop remainders; require exact tiling.
    assert H % PATCH == 0 and W % PATCH == 0, "H and W must be multiples of 16"
    gh, gw = H // PATCH, W // PATCH
    D = conv_w.shape[0]
    K = C * PATCH * PATCH
    NC = fc_w.shape[0]

    # ---- algebraic fold of conv_proj -> avgpool -> fc (done once, in f32) ----
    wc = conv_w.reshape(D, K).T.astype(jnp.float32)                # (K, D), k=(c,kh,kw)
    wf = fc_w.T.astype(jnp.float32)                                # (D, NC)
    w_fold = wc @ wf                                               # (K, NC)
    b_fold = conv_b.reshape(1, D).astype(jnp.float32) @ wf + fc_b.reshape(1, NC)

    # ---- pooled patch features directly from NCHW (fused reduction, no transpose copy)
    # pooled[b, (c,kh,kw)] = mean over the (gh,gw) patch grid of x[b, c, 16*i+kh, 16*j+kw]
    pooled = (
        x_nchw.astype(jnp.float32)
        .reshape(B, C, gh, PATCH, gw, PATCH)
        .mean(axis=(2, 4))
        .reshape(B, K)
    )

    # ---- lane-dense class padding + sublane-aligned batch padding ----
    NC_pad = _round_up(NC, 128)
    BB = batch_block
    B_pad = _round_up(B, BB)
    w_fold_p = jnp.zeros((K, NC_pad), jnp.float32).at[:, :NC].set(w_fold)
    b_fold_p = jnp.zeros((1, NC_pad), jnp.float32).at[:, :NC].set(b_fold)
    pooled_p = jnp.zeros((B_pad, K), jnp.float32).at[:B].set(pooled)

    out = pl.pallas_call(
        folded_head_kernel,
        out_shape=jax.ShapeDtypeStruct((B_pad, NC_pad), jnp.float32),
        grid_spec=pltpu.PrefetchScalarGridSpec(
            num_scalar_prefetch=0,
            grid=(B_pad // BB,),
            in_specs=[
                pl.BlockSpec((BB, K), lambda b: (b, 0)),        # batch chunk of features
                pl.BlockSpec((K, NC_pad), lambda b: (0, 0)),    # folded weight, resident
                pl.BlockSpec((1, NC_pad), lambda b: (0, 0)),    # folded bias, resident
            ],
            out_specs=pl.BlockSpec((BB, NC_pad), lambda b: (b, 0)),
        ),
        compiler_params=pltpu.CompilerParams(
            # batch chunks are independent -> v7x's 2 TensorCores each take half
            dimension_semantics=("parallel",),
        ),
    )(pooled_p, w_fold_p, b_fold_p)

    return out[:B, :NC]


if __name__ == "__main__":
    key = jax.random.PRNGKey(0)
    k1, k2, k3, k4, k5 = jax.random.split(key, 5)

    # Small shapes consistent with the module: 3-channel image, 32x32 -> 2x2 patch grid.
    B, C, H, W = 2, 3, 32, 32
    NUM_CLASSES = 10

    x = jax.random.normal(k1, (B, C, H, W), dtype=jnp.float32)
    conv_w = 0.02 * jax.random.normal(k2, (HIDDEN, C, PATCH, PATCH), dtype=jnp.float32)
    conv_b = 0.02 * jax.random.normal(k3, (HIDDEN,), dtype=jnp.float32)
    fc_w = 0.02 * jax.random.normal(k4, (NUM_CLASSES, HIDDEN), dtype=jnp.float32)
    fc_b = 0.02 * jax.random.normal(k5, (NUM_CLASSES,), dtype=jnp.float32)

    out = vision_transformer_forward(x, conv_w, conv_b, fc_w, fc_b)
    out = jax.block_until_ready(out)

    # Pure-JAX reference (same semantics as the PyTorch forward: conv -> pool -> fc).
    conv_out = jax.lax.conv_general_dilated(
        x, conv_w, window_strides=(PATCH, PATCH), padding="VALID",
        dimension_numbers=("NCHW", "OIHW", "NCHW"),
    ) + conv_b[None, :, None, None]
    pooled_ref = conv_out.mean(axis=(2, 3))          # AdaptiveAvgPool2d((1,1)) + flatten(1)
    ref = pooled_ref @ fc_w.T + fc_b[None, :]

    assert out.shape == (B, NUM_CLASSES)
    assert jnp.allclose(out, ref, atol=1e-3, rtol=1e-3), "mismatch vs reference"
    print("KERNEL_OK")
</pallas_src>

<mosaic_0001>
module attributes {stable_mosaic.version = 11 : i64} {
  func.func @folded_head_kernel(%arg0: i32, %arg1: memref<8x768xf32, #tpu.memory_space<vmem>>, %arg2: memref<768x128xf32, #tpu.memory_space<vmem>>, %arg3: memref<1x128xf32, #tpu.memory_space<vmem>>, %arg4: memref<8x128xf32, #tpu.memory_space<vmem>>) attributes {dimension_semantics = [#tpu.dimension_semantics<parallel>], iteration_bounds = array<i64: 1>, scalar_prefetch = 0 : i64, scratch_operands = 0 : i64, tpu.core_type = #tpu.core_type<tc>, window_params = [{transform_indices = @transform_0, window_bounds = array<i64: 8, 768>}, {pipeline_mode = #tpu.pipeline_mode<synchronous>, transform_indices = @transform_1, window_bounds = array<i64: 768, 128>}, {pipeline_mode = #tpu.pipeline_mode<synchronous>, transform_indices = @transform_2, window_bounds = array<i64: 1, 128>}, {transform_indices = @transform_3, window_bounds = array<i64: 8, 128>}]} {
    %c0 = arith.constant 0 : index
    %c0_0 = arith.constant 0 : index
    %0 = vector.load %arg1[%c0, %c0_0] : memref<8x768xf32, #tpu.memory_space<vmem>>, vector<8x768xf32>
    %c0_1 = arith.constant 0 : index
    %c0_2 = arith.constant 0 : index
    %1 = vector.load %arg2[%c0_1, %c0_2] : memref<768x128xf32, #tpu.memory_space<vmem>>, vector<768x128xf32>
    %cst = arith.constant dense<0.000000e+00> : vector<8x128xf32>
    %2 = tpu.matmul %0, %1, %cst {dimension_numbers = #tpu.dot_dimension_numbers<[1], [0], [0], [1], [0, 0, 1, 1], [], []>} : vector<8x768xf32>, vector<768x128xf32>, vector<8x128xf32> -> vector<8x128xf32>
    %c0_3 = arith.constant 0 : index
    %c0_4 = arith.constant 0 : index
    %3 = vector.load %arg3[%c0_3, %c0_4] : memref<1x128xf32, #tpu.memory_space<vmem>>, vector<1x128xf32>
    %4 = vector.broadcast %3 : vector<1x128xf32> to vector<8x128xf32>
    %5 = arith.addf %2, %4 : vector<8x128xf32>
    %c0_5 = arith.constant 0 : index
    %c0_6 = arith.constant 0 : index
    %6 = vector.load %arg4[%c0_5, %c0_6] : memref<8x128xf32, #tpu.memory_space<vmem>>, vector<8x128xf32>
    tpu.vector_store %arg4[%c0_5, %c0_6], %5 {strides = array<i32>} : memref<8x128xf32, #tpu.memory_space<vmem>>, vector<8x128xf32>,
    return
  }
  func.func @transform_0(%arg0: i32) -> (i32, i32) {
    %c0_i32 = arith.constant 0 : i32
    %c0_i32_0 = arith.constant 0 : i32
    return %arg0, %c0_i32 : i32, i32
  }
  func.func @transform_1(%arg0: i32) -> (i32, i32) {
    %c0_i32 = arith.constant 0 : i32
    %c0_i32_0 = arith.constant 0 : i32
    %c0_i32_1 = arith.constant 0 : i32
    return %c0_i32, %c0_i32_0 : i32, i32
  }
  func.func @transform_2(%arg0: i32) -> (i32, i32) {
    %c0_i32 = arith.constant 0 : i32
    %c0_i32_0 = arith.constant 0 : i32
    %c0_i32_1 = arith.constant 0 : i32
    return %c0_i32, %c0_i32_0 : i32, i32
  }
  func.func @transform_3(%arg0: i32) -> (i32, i32) {
    %c0_i32 = arith.constant 0 : i32
    %c0_i32_0 = arith.constant 0 : i32
    return %arg0, %c0_i32 : i32, i32
  }
}

</mosaic_0001>

<llo_original>
// kernel: vision_transformer_forward.1
$region0: #{vision_transformer_forward.1}
  #allocation0 [shape = 'u32[]', space=smem, size = 0x4, offset = 0x4, fixed_abs, tag = 'smem constant byte address 0x4 - core index']
  #allocation1 [shape = 'u32[144,128]{1,0:T(1,128)}', space=vmem, size = 0x12000, scoped, tag = 'internal scratch']
  %s0 = inlined_call_operand.vmem [shape: f32[8,768], index: 0, kind: input, shape index: {}]
  %s1 = inlined_call_operand.vmem [shape: f32[768,128], index: 1, kind: input, shape index: {}]
  %s2 = inlined_call_operand.vmem [shape: f32[1,128], index: 2, kind: input, shape index: {}]
  %s3 = inlined_call_operand.vmem [shape: f32[8,128], index: 3, kind: output, shape index: {}]
  %s4 = sld [smem:[#allocation0]]
  $region22: #{vision_transformer_forward.1} parent=0
    _
  %s6 = ssub.s32 1, %s4
  %s7 = scalar_select 0, %s6, %s4
  // Predicated region
  $region2: #{vision_transformer_forward.1} parent=0 // pred_check
    _
  $region3: #{vision_transformer_forward.1} parent=0 // pred_check_branch
    %9 = sbr.rel (0) target = $region5
  $region4: #{vision_transformer_forward.1} parent=0 // pred_region
    _
  $region5: #{vision_transformer_forward.1} parent=0 // pred_fallthru
    _
  // Predicated region
  $region6: #{vision_transformer_forward.1} parent=0 // pred_check
    _
  $region7: #{vision_transformer_forward.1} parent=0 // pred_check_branch
    %11 = sbr.rel (0) target = $region9
  $region8: #{vision_transformer_forward.1} parent=0 // pred_region
    _
  $region9: #{vision_transformer_forward.1} parent=0 // pred_fallthru
    _
  // Predicated region
  $region10: #{vision_transformer_forward.1} parent=0 // pred_check
    _
  $region11: #{vision_transformer_forward.1} parent=0 // pred_check_branch
    %13 = sbr.rel (0) target = $region13
  $region12: #{vision_transformer_forward.1} parent=0 // pred_region
    _
  $region13: #{vision_transformer_forward.1} parent=0 // pred_fallthru
    _
  %v14 = vld [vmem:[%s0] sm:$0xff]
  %v15 = vld [vmem:[%s0 + $0x8] sm:$0xff]
  %v16 = vld [vmem:[%s0 + $0x10] sm:$0xff]
  %v17 = vld [vmem:[%s0 + $0x18] sm:$0xff]
  %v18 = vld [vmem:[%s0 + $0x20] sm:$0xff]
  %v19 = vld [vmem:[%s0 + $0x28] sm:$0xff]
  %v20 = vld [vmem:[%s1] sm:$0xff]
  %v21 = vld [vmem:[%s1 + $0x8] sm:$0xff]
  %v22 = vld [vmem:[%s1 + $0x10] sm:$0xff]
  %v23 = vld [vmem:[%s1 + $0x18] sm:$0xff]
  %v24 = vld [vmem:[%s1 + $0x20] sm:$0xff]
  %v25 = vld [vmem:[%s1 + $0x28] sm:$0xff]
  %v26 = vld [vmem:[%s1 + $0x30] sm:$0xff]
  %v27 = vld [vmem:[%s1 + $0x38] sm:$0xff]
  %v28 = vld [vmem:[%s1 + $0x40] sm:$0xff]
  %v29 = vld [vmem:[%s1 + $0x48] sm:$0xff]
  %v30 = vld [vmem:[%s1 + $0x50] sm:$0xff]
  %v31 = vld [vmem:[%s1 + $0x58] sm:$0xff]
  %v32 = vld [vmem:[%s1 + $0x60] sm:$0xff]
  %v33 = vld [vmem:[%s1 + $0x68] sm:$0xff]
  %v34 = vld [vmem:[%s1 + $0x70] sm:$0xff]
  %v35 = vld [vmem:[%s1 + $0x78] sm:$0xff]
  %v36 = vld [vmem:[%s1 + $0x80] sm:$0xff]
  %v37 = vld [vmem:[%s1 + $0x88] sm:$0xff]
  %v38 = vld [vmem:[%s1 + $0x90] sm:$0xff]
  %v39 = vld [vmem:[%s1 + $0x98] sm:$0xff]
  %v40 = vld [vmem:[%s1 + $0xa0] sm:$0xff]
  %v41 = vld [vmem:[%s1 + $0xa8] sm:$0xff]
  %v42 = vld [vmem:[%s1 + $0xb0] sm:$0xff]
  %v43 = vld [vmem:[%s1 + $0xb8] sm:$0xff]
  %v44 = vld [vmem:[%s1 + $0xc0] sm:$0xff]
  %v45 = vld [vmem:[%s1 + $0xc8] sm:$0xff]
  %v46 = vld [vmem:[%s1 + $0xd0] sm:$0xff]
  %v47 = vld [vmem:[%s1 + $0xd8] sm:$0xff]
  %v48 = vld [vmem:[%s1 + $0xe0] sm:$0xff]
  %v49 = vld [vmem:[%s1 + $0xe8] sm:$0xff]
  %v50 = vld [vmem:[%s1 + $0xf0] sm:$0xff]
  %v51 = vld [vmem:[%s1 + $0xf8] sm:$0xff]
  %v52 = vld [vmem:[%s1 + $0x100] sm:$0xff]
  %v53 = vld [vmem:[%s1 + $0x108] sm:$0xff]
  %v54 = vld [vmem:[%s1 + $0x110] sm:$0xff]
  %v55 = vld [vmem:[%s1 + $0x118] sm:$0xff]
  %v56 = vld [vmem:[%s1 + $0x120] sm:$0xff]
  %v57 = vld [vmem:[%s1 + $0x128] sm:$0xff]
  %v58 = vld [vmem:[%s1 + $0x130] sm:$0xff]
  %v59 = vld [vmem:[%s1 + $0x138] sm:$0xff]
  %v60 = vld [vmem:[%s1 + $0x140] sm:$0xff]
  %v61 = vld [vmem:[%s1 + $0x148] sm:$0xff]
  %v62 = vld [vmem:[%s1 + $0x150] sm:$0xff]
  %v63 = vld [vmem:[%s1 + $0x158] sm:$0xff]
  %v64 = vld [vmem:[%s1 + $0x160] sm:$0xff]
  %v65 = vld [vmem:[%s1 + $0x168] sm:$0xff]
  %v66 = vld [vmem:[%s1 + $0x170] sm:$0xff]
  %v67 = vld [vmem:[%s1 + $0x178] sm:$0xff]
  %v68 = vld [vmem:[%s1 + $0x180] sm:$0xff]
  %v69 = vld [vmem:[%s1 + $0x188] sm:$0xff]
  %v70 = vld [vmem:[%s1 + $0x190] sm:$0xff]
  %v71 = vld [vmem:[%s1 + $0x198] sm:$0xff]
  %v72 = vld [vmem:[%s1 + $0x1a0] sm:$0xff]
  %v73 = vld [vmem:[%s1 + $0x1a8] sm:$0xff]
  %v74 = vld [vmem:[%s1 + $0x1b0] sm:$0xff]
  %v75 = vld [vmem:[%s1 + $0x1b8] sm:$0xff]
  %v76 = vld [vmem:[%s1 + $0x1c0] sm:$0xff]
  %v77 = vld [vmem:[%s1 + $0x1c8] sm:$0xff]
  %v78 = vld [vmem:[%s1 + $0x1d0] sm:$0xff]
  %v79 = vld [vmem:[%s1 + $0x1d8] sm:$0xff]
  %v80 = vld [vmem:[%s1 + $0x1e0] sm:$0xff]
  %v81 = vld [vmem:[%s1 + $0x1e8] sm:$0xff]
  %v82 = vld [vmem:[%s1 + $0x1f0] sm:$0xff]
  %v83 = vld [vmem:[%s1 + $0x1f8] sm:$0xff]
  %v84 = vld [vmem:[%s1 + $0x200] sm:$0xff]
  %v85 = vld [vmem:[%s1 + $0x208] sm:$0xff]
  %v86 = vld [vmem:[%s1 + $0x210] sm:$0xff]
  %v87 = vld [vmem:[%s1 + $0x218] sm:$0xff]
  %v88 = vld [vmem:[%s1 + $0x220] sm:$0xff]
  %v89 = vld [vmem:[%s1 + $0x228] sm:$0xff]
  %v90 = vld [vmem:[%s1 + $0x230] sm:$0xff]
  %v91 = vld [vmem:[%s1 + $0x238] sm:$0xff]
  %v92 = vld [vmem:[%s1 + $0x240] sm:$0xff]
  %v93 = vld [vmem:[%s1 + $0x248] sm:$0xff]
  %v94 = vld [vmem:[%s1 + $0x250] sm:$0xff]
  %v95 = vld [vmem:[%s1 + $0x258] sm:$0xff]
  %v96 = vld [vmem:[%s1 + $0x260] sm:$0xff]
  %v97 = vld [vmem:[%s1 + $0x268] sm:$0xff]
  %v98 = vld [vmem:[%s1 + $0x270] sm:$0xff]
  %v99 = vld [vmem:[%s1 + $0x278] sm:$0xff]
  %v100 = vld [vmem:[%s1 + $0x280] sm:$0xff]
  %v101 = vld [vmem:[%s1 + $0x288] sm:$0xff]
  %v102 = vld [vmem:[%s1 + $0x290] sm:$0xff]
  %v103 = vld [vmem:[%s1 + $0x298] sm:$0xff]
  %v104 = vld [vmem:[%s1 + $0x2a0] sm:$0xff]
  %v105 = vld [vmem:[%s1 + $0x2a8] sm:$0xff]
  %v106 = vld [vmem:[%s1 + $0x2b0] sm:$0xff]
  %v107 = vld [vmem:[%s1 + $0x2b8] sm:$0xff]
  %v108 = vld [vmem:[%s1 + $0x2c0] sm:$0xff]
  %v109 = vld [vmem:[%s1 + $0x2c8] sm:$0xff]
  %v110 = vld [vmem:[%s1 + $0x2d0] sm:$0xff]
  %v111 = vld [vmem:[%s1 + $0x2d8] sm:$0xff]
  %v112 = vld [vmem:[%s1 + $0x2e0] sm:$0xff]
  %v113 = vld [vmem:[%s1 + $0x2e8] sm:$0xff]
  %v114 = vld [vmem:[%s1 + $0x2f0] sm:$0xff]
  %v115 = vld [vmem:[%s1 + $0x2f8] sm:$0xff]
  %v116 = vld [vmem:[%s2] sm:$0x1]
  %v118 = vlaneseq
  %v119 = vshrl.u32 %v118, 7
  %v120 = vsub.s32 0, %v119
  %v121 = vrot.slane %v116, %v120
  %123 = vmatprep.subr.mxu0 0.0
  %124 = vmatpush1.msra.mxu0 %v35
  %125 = vmatprep.subr.mxu0 0.0
  %126 = vmatpush1.msra.mxu0 %v34
  %127 = vmatprep.subr.mxu0 0.0
  %128 = vmatpush1.msra.mxu0 %v33
  %129 = vmatprep.subr.mxu0 0.0
  %130 = vmatpush1.msra.mxu0 %v32
  %131 = vmatprep.subr.mxu0 0.0
  %132 = vmatpush1.msra.mxu0 %v31
  %133 = vmatprep.subr.mxu0 0.0
  %134 = vmatpush1.msra.mxu0 %v30
  %135 = vmatprep.subr.mxu0 0.0
  %136 = vmatpush1.msra.mxu0 %v29
  %137 = vmatprep.subr.mxu0 0.0
  %138 = vmatpush1.msra.mxu0 %v28
  %139 = vmatprep.subr.mxu0 0.0
  %140 = vmatpush1.msra.mxu0 %v27
  %141 = vmatprep.subr.mxu0 0.0
  %142 = vmatpush1.msra.mxu0 %v26
  %143 = vmatprep.subr.mxu0 0.0
  %144 = vmatpush1.msra.mxu0 %v25
  %145 = vmatprep.subr.mxu0 0.0
  %146 = vmatpush1.msra.mxu0 %v24
  %147 = vmatprep.subr.mxu0 0.0
  %148 = vmatpush1.msra.mxu0 %v23
  %149 = vmatprep.subr.mxu0 0.0
  %150 = vmatpush1.msra.mxu0 %v22
  %151 = vmatprep.subr.mxu0 0.0
  %152 = vmatpush1.msra.mxu0 %v21
  %153 = vmatprep.subr.mxu0 0.0
  %154 = vmatpush1.msra.mxu0 %v20
  %155 = vmatprep.subr.mxu0 0.0
  %156 = vmatpush2.msra.mxu0 %v51
  %157 = vmatprep.subr.mxu0 0.0
  %158 = vmatpush2.msra.mxu0 %v50
  %159 = vmatprep.subr.mxu0 0.0
  %160 = vmatpush2.msra.mxu0 %v49
  %161 = vmatprep.subr.mxu0 0.0
  %162 = vmatpush2.msra.mxu0 %v48
  %163 = vmatprep.subr.mxu0 0.0
  %164 = vmatpush2.msra.mxu0 %v47
  %165 = vmatprep.subr.mxu0 0.0
  %166 = vmatpush2.msra.mxu0 %v46
  %167 = vmatprep.subr.mxu0 0.0
  %168 = vmatpush2.msra.mxu0 %v45
  %169 = vmatprep.subr.mxu0 0.0
  %170 = vmatpush2.msra.mxu0 %v44
  %171 = vmatprep.subr.mxu0 0.0
  %172 = vmatpush2.msra.mxu0 %v43
  %173 = vmatprep.subr.mxu0 0.0
  %174 = vmatpush2.msra.mxu0 %v42
  %175 = vmatprep.subr.mxu0 0.0
  %176 = vmatpush2.msra.mxu0 %v41
  %177 = vmatprep.subr.mxu0 0.0
  %178 = vmatpush2.msra.mxu0 %v40
  %179 = vmatprep.subr.mxu0 0.0
  %180 = vmatpush2.msra.mxu0 %v39
  %181 = vmatprep.subr.mxu0 0.0
  %182 = vmatpush2.msra.mxu0 %v38
  %183 = vmatprep.subr.mxu0 0.0
  %184 = vmatpush2.msra.mxu0 %v37
  %185 = vmatprep.subr.mxu0 0.0
  %186 = vmatpush2.msra.mxu0 %v36
  %187 = vmatprep.mubr.f32.mxu0 %v15
  %188 = vmatmul.mubr.f32.gmra.mxu0 %v14
  %v189 = vpop.f32.mrf.mxu0
  %v190 = vadd.f32 %v121, %v189
  %v191 = vpop.f32.mrf.mxu0
  %192 = vdwg.mxu0
  %193 = vmatprep.subr.mxu0 0.0
  %194 = vmatpush1.msra.mxu0 %v67
  %195 = vmatprep.subr.mxu0 0.0
  %196 = vmatpush1.msra.mxu0 %v66
  %197 = vmatprep.subr.mxu0 0.0
  %198 = vmatpush1.msra.mxu0 %v65
  %199 = vmatprep.subr.mxu0 0.0
  %200 = vmatpush1.msra.mxu0 %v64
  %201 = vmatprep.subr.mxu0 0.0
  %202 = vmatpush1.msra.mxu0 %v63
  %203 = vmatprep.subr.mxu0 0.0
  %204 = vmatpush1.msra.mxu0 %v62
  %205 = vmatprep.subr.mxu0 0.0
  %206 = vmatpush1.msra.mxu0 %v61
  %207 = vmatprep.subr.mxu0 0.0
  %208 = vmatpush1.msra.mxu0 %v60
  %209 = vmatprep.subr.mxu0 0.0
  %210 = vmatpush1.msra.mxu0 %v59
  %211 = vmatprep.subr.mxu0 0.0
  %212 = vmatpush1.msra.mxu0 %v58
  %213 = vmatprep.subr.mxu0 0.0
  %214 = vmatpush1.msra.mxu0 %v57
  %215 = vmatprep.subr.mxu0 0.0
  %216 = vmatpush1.msra.mxu0 %v56
  %217 = vmatprep.subr.mxu0 0.0
  %218 = vmatpush1.msra.mxu0 %v55
  %219 = vmatprep.subr.mxu0 0.0
  %220 = vmatpush1.msra.mxu0 %v54
  %221 = vmatprep.subr.mxu0 0.0
  %222 = vmatpush1.msra.mxu0 %v53
  %223 = vmatprep.subr.mxu0 0.0
  %224 = vmatpush1.msra.mxu0 %v52
  %225 = vmatprep.subr.mxu0 0.0
  %226 = vmatpush2.msra.mxu0 %v83
  %227 = vmatprep.subr.mxu0 0.0
  %228 = vmatpush2.msra.mxu0 %v82
  %229 = vmatprep.subr.mxu0 0.0
  %230 = vmatpush2.msra.mxu0 %v81
  %231 = vmatprep.subr.mxu0 0.0
  %232 = vmatpush2.msra.mxu0 %v80
  %233 = vmatprep.subr.mxu0 0.0
  %234 = vmatpush2.msra.mxu0 %v79
  %235 = vmatprep.subr.mxu0 0.0
  %236 = vmatpush2.msra.mxu0 %v78
  %237 = vmatprep.subr.mxu0 0.0
  %238 = vmatpush2.msra.mxu0 %v77
  %239 = vmatprep.subr.mxu0 0.0
  %240 = vmatpush2.msra.mxu0 %v76
  %241 = vmatprep.subr.mxu0 0.0
  %242 = vmatpush2.msra.mxu0 %v75
  %243 = vmatprep.subr.mxu0 0.0
  %244 = vmatpush2.msra.mxu0 %v74
  %245 = vmatprep.subr.mxu0 0.0
  %246 = vmatpush2.msra.mxu0 %v73
  %247 = vmatprep.subr.mxu0 0.0
  %248 = vmatpush2.msra.mxu0 %v72
  %249 = vmatprep.subr.mxu0 0.0
  %250 = vmatpush2.msra.mxu0 %v71
  %251 = vmatprep.subr.mxu0 0.0
  %252 = vmatpush2.msra.mxu0 %v70
  %253 = vmatprep.subr.mxu0 0.0
  %254 = vmatpush2.msra.mxu0 %v69
  %255 = vmatprep.subr.mxu0 0.0
  %256 = vmatpush2.msra.mxu0 %v68
  %257 = vmatprep.mubr.f32.mxu0 %v17
  %258 = vmatmul.mubr.f32.gmra.mxu0 %v16
  %v259 = vpop.f32.mrf.mxu0
  %v260 = vadd.f32 %v190, %v259
  %v261 = vpop.f32.mrf.mxu0
  %262 = vdwg.mxu0
  %263 = vmatprep.subr.mxu0 0.0
  %264 = vmatpush1.msra.mxu0 %v99
  %265 = vmatprep.subr.mxu0 0.0
  %266 = vmatpush1.msra.mxu0 %v98
  %267 = vmatprep.subr.mxu0 0.0
  %268 = vmatpush1.msra.mxu0 %v97
  %269 = vmatprep.subr.mxu0 0.0
  %270 = vmatpush1.msra.mxu0 %v96
  %271 = vmatprep.subr.mxu0 0.0
  %272 = vmatpush1.msra.mxu0 %v95
  %273 = vmatprep.subr.mxu0 0.0
  %274 = vmatpush1.msra.mxu0 %v94
  %275 = vmatprep.subr.mxu0 0.0
  %276 = vmatpush1.msra.mxu0 %v93
  %277 = vmatprep.subr.mxu0 0.0
  %278 = vmatpush1.msra.mxu0 %v92
  %279 = vmatprep.subr.mxu0 0.0
  %280 = vmatpush1.msra.mxu0 %v91
  %281 = vmatprep.subr.mxu0 0.0
  %282 = vmatpush1.msra.mxu0 %v90
  %283 = vmatprep.subr.mxu0 0.0
  %284 = vmatpush1.msra.mxu0 %v89
  %285 = vmatprep.subr.mxu0 0.0
  %286 = vmatpush1.msra.mxu0 %v88
  %287 = vmatprep.subr.mxu0 0.0
  %288 = vmatpush1.msra.mxu0 %v87
  %289 = vmatprep.subr.mxu0 0.0
  %290 = vmatpush1.msra.mxu0 %v86
  %291 = vmatprep.subr.mxu0 0.0
  %292 = vmatpush1.msra.mxu0 %v85
  %293 = vmatprep.subr.mxu0 0.0
  %294 = vmatpush1.msra.mxu0 %v84
  %295 = vmatprep.subr.mxu0 0.0
  %296 = vmatpush2.msra.mxu0 %v115
  %297 = vmatprep.subr.mxu0 0.0
  %298 = vmatpush2.msra.mxu0 %v114
  %299 = vmatprep.subr.mxu0 0.0
  %300 = vmatpush2.msra.mxu0 %v113
  %301 = vmatprep.subr.mxu0 0.0
  %302 = vmatpush2.msra.mxu0 %v112
  %303 = vmatprep.subr.mxu0 0.0
  %304 = vmatpush2.msra.mxu0 %v111
  %305 = vmatprep.subr.mxu0 0.0
  %306 = vmatpush2.msra.mxu0 %v110
  %307 = vmatprep.subr.mxu0 0.0
  %308 = vmatpush2.msra.mxu0 %v109
  %309 = vmatprep.subr.mxu0 0.0
  %310 = vmatpush2.msra.mxu0 %v108
  %311 = vmatprep.subr.mxu0 0.0
  %312 = vmatpush2.msra.mxu0 %v107
  %313 = vmatprep.subr.mxu0 0.0
  %314 = vmatpush2.msra.mxu0 %v106
  %315 = vmatprep.subr.mxu0 0.0
  %316 = vmatpush2.msra.mxu0 %v105
  %317 = vmatprep.subr.mxu0 0.0
  %318 = vmatpush2.msra.mxu0 %v104
  %319 = vmatprep.subr.mxu0 0.0
  %320 = vmatpush2.msra.mxu0 %v103
  %321 = vmatprep.subr.mxu0 0.0
  %322 = vmatpush2.msra.mxu0 %v102
  %323 = vmatprep.subr.mxu0 0.0
  %324 = vmatpush2.msra.mxu0 %v101
  %325 = vmatprep.subr.mxu0 0.0
  %326 = vmatpush2.msra.mxu0 %v100
  %327 = vmatprep.mubr.f32.mxu0 %v19
  %328 = vmatmul.mubr.f32.gmra.mxu0 %v18
  %v329 = vpop.f32.mrf.mxu0
  %v330 = vadd.f32 %v260, %v329
  %v331 = vpop.f32.mrf.mxu0
  %332 = vdwg.mxu0
  %333 = vst [vmem:[%s3] sm:$0xff] %v330
  // Predicated region
  $region14: #{vision_transformer_forward.1} parent=0 // pred_check
    _
  $region15: #{vision_transformer_forward.1} parent=0 // pred_check_branch
    %335 = sbr.rel (0) target = $region17
  $region16: #{vision_transformer_forward.1} parent=0 // pred_region
    _
  $region17: #{vision_transformer_forward.1} parent=0 // pred_fallthru
    _
  // Predicated region
  $region18: #{vision_transformer_forward.1} parent=0 // pred_check
    _
  $region19: #{vision_transformer_forward.1} parent=0 // pred_check_branch
    %337 = sbr.rel (0) target = $region21
  $region20: #{vision_transformer_forward.1} parent=0 // pred_region
    _
  $region21: #{vision_transformer_forward.1} parent=0 // pred_fallthru
    _

</llo_original>
